<compile_context>
chip_gen: v7x
topology: tpu7x:2x2x1
jax: 0.10.0
libtpu: 0.0.40
codegen_flags: <defaults>
</compile_context>

<pallas_src>
import functools

import numpy as np
import jax
import jax.numpy as jnp
from jax import lax
from jax.experimental import pallas as pl
from jax.experimental.pallas import tpu as pltpu


# ----------------------------------------------------------------------------
# Host-side weight-matrix construction (glue, plain numpy; torchvision semantics)
# ----------------------------------------------------------------------------
def _triangle(t):
    return max(0.0, 1.0 - abs(t))


def _bilinear_aa_matrix(in_size, out_size):
    """Separable antialiased-bilinear resampling matrix (out_size, in_size).

    Matches torchvision.transforms.Resize(..., BILINEAR, antialias=True)
    (PIL-style triangle filter); for upsampling it degenerates to standard
    align_corners=False bilinear.
    """
    scale = in_size / out_size
    filterscale = max(scale, 1.0)
    support = 1.0 * filterscale  # triangle filter support = 1
    W = np.zeros((out_size, in_size), dtype=np.float32)
    for i in range(out_size):
        center = (i + 0.5) * scale
        xmin = max(int(center - support + 0.5), 0)
        xmax = min(int(center + support + 0.5), in_size)
        ws = [_triangle((x - center + 0.5) / filterscale) for x in range(xmin, xmax)]
        total = sum(ws)
        for j, x in enumerate(range(xmin, xmax)):
            W[i, x] = ws[j] / total
    return W


def _output_size(h, w, scale_size):
    """torchvision Resize(int): short side -> scale_size, keep aspect ratio."""
    if w < h:
        ow = scale_size
        oh = int(scale_size * h / w)
    else:
        oh = scale_size
        ow = int(scale_size * w / h)
    return oh, ow


def _vmem_capacity_bytes():
    try:
        return int(pltpu.get_tpu_info().vmem_capacity_bytes)
    except Exception:
        return 64 * 1024 * 1024  # conservative default (v7x per-core VMEM)


def _pick_block_planes(nc, h, w, out_h, out_w, in_itemsize, out_itemsize):
    """Plane-block size B from a generation-aware VMEM budget + grid-step floor."""
    vmem_cap = _vmem_capacity_bytes()
    budget = int(0.40 * vmem_cap)

    # Resident bf16 weight matrices (double-buffered by the pipeline).
    const_bytes = 2 * 2 * (out_h * h + w * out_w)
    avail = max(budget - const_bytes, 1)

    # Per-plane footprint: double-buffered input block + double-buffered output
    # block.  Per-plane temporaries (bf16 plane, intermediate, f32 out) live
    # only inside one fori_loop iteration -> vregs, not block-level VMEM.
    per_plane = 2 * h * w * in_itemsize + 2 * out_h * out_w * out_itemsize
    per_plane = int(per_plane * 1.25) + 1  # fudge for (8,128) padding / relayout

    max_b = max(1, avail // per_plane)

    # Keep enough grid steps: >= 4 when possible (>= 2 per TensorCore on
    # dual-core chips, and room for DMA/compute pipelining everywhere),
    # else >= 2.
    if nc >= 4:
        max_b = min(max_b, -(-nc // 4))
    elif nc >= 2:
        max_b = min(max_b, -(-nc // 2))
    return max(1, min(int(max_b), nc))


# ----------------------------------------------------------------------------
# Pallas kernel: separable resize of a block of B (H, W) planes
# ----------------------------------------------------------------------------
def _resize_plane_block_kernel(x_ref, rwt_ref, lh_ref, o_ref, *, h_first, block_b):
    rwt = rwt_ref[...]   # (W, out_w)  bf16, pre-transposed on host
    lh = lh_ref[...]     # (out_h, H)  bf16
    is_int_out = jnp.issubdtype(o_ref.dtype, jnp.integer)  # trace-time constant

    def body(i, carry):
        x = x_ref[i].astype(jnp.bfloat16)                       # (H, W) cast in VMEM
        if h_first:
            # H-resize first, then W-resize.
            t = jnp.dot(lh, x, preferred_element_type=jnp.float32)         # (out_h, W)
            out = jnp.dot(t.astype(jnp.bfloat16), rwt,
                          preferred_element_type=jnp.float32)              # (out_h, out_w)
        else:
            # W-resize first, then H-resize.
            t = jnp.dot(x, rwt, preferred_element_type=jnp.float32)        # (H, out_w)
            out = jnp.dot(lh, t.astype(jnp.bfloat16),
                          preferred_element_type=jnp.float32)              # (out_h, out_w)
        if is_int_out:
            out = jnp.round(out)
        o_ref[i] = out.astype(o_ref.dtype)
        return carry

    lax.fori_loop(0, block_b, body, 0)


def _separable_resize(x_nchw, lh, rwt, out_dtype):
    n, c, h, w = x_nchw.shape
    out_h, out_w = lh.shape[0], rwt.shape[1]
    nc = n * c

    x_flat = x_nchw.reshape(nc, h, w)          # native dtype; bf16 cast happens in VMEM
    lh = jnp.asarray(lh, jnp.bfloat16)         # bf16 MXU operands (f32 accumulation)
    rwt = jnp.asarray(rwt, jnp.bfloat16)

    # Stage order minimizing per-plane FLOPs / intermediate size.
    w_first_cost = h * out_w * (w + out_h)
    h_first_cost = out_h * w * (h + out_w)
    h_first = h_first_cost < w_first_cost

    in_itemsize = jnp.dtype(x_nchw.dtype).itemsize
    out_itemsize = jnp.dtype(out_dtype).itemsize
    block_b = _pick_block_planes(nc, h, w, out_h, out_w, in_itemsize, out_itemsize)
    grid = (pl.cdiv(nc, block_b),)             # partial last block OK (planes independent)

    vmem_cap = _vmem_capacity_bytes()
    kernel = functools.partial(_resize_plane_block_kernel,
                               h_first=h_first, block_b=block_b)

    out_flat = pl.pallas_call(
        kernel,
        out_shape=jax.ShapeDtypeStruct((nc, out_h, out_w), out_dtype),
        grid_spec=pltpu.PrefetchScalarGridSpec(
            num_scalar_prefetch=0,
            grid=grid,
            in_specs=[
                pl.BlockSpec((block_b, h, w), lambda i: (i, 0, 0)),
                pl.BlockSpec((w, out_w), lambda i: (0, 0)),      # resident constant
                pl.BlockSpec((out_h, h), lambda i: (0, 0)),      # resident constant
            ],
            out_specs=pl.BlockSpec((block_b, out_h, out_w), lambda i: (i, 0, 0)),
        ),
        compiler_params=pltpu.CompilerParams(
            dimension_semantics=("parallel",),
            vmem_limit_bytes=int(0.75 * vmem_cap),
        ),
    )(x_flat, rwt, lh)
    return out_flat.reshape(n, c, out_h, out_w)


# ----------------------------------------------------------------------------
# Module-equivalent wrapper
# ----------------------------------------------------------------------------
class Resize:
    """Pallas equivalent of the PyTorch Resize module (forward only)."""

    def __init__(self, scale_size):
        self.scale_size = scale_size

    def __call__(self, sample_dict):
        image = sample_dict["image"]   # (N, C, H, W) float, values in [0, 1]
        label = sample_dict["label"]   # (N, C, H, W) (e.g. int class ids)

        # ---- image: antialiased bilinear via Pallas (two MXU matmuls/plane) ----
        _, _, h, w = image.shape
        out_h, out_w = _output_size(h, w, self.scale_size)
        lh_img = _bilinear_aa_matrix(h, out_h)
        rwt_img = _bilinear_aa_matrix(w, out_w).T   # pre-transposed (W, out_w)
        image_out = _separable_resize(image, lh_img, rwt_img, image.dtype)

        # ---- label: nearest neighbor = pure gather (exact, dtype preserved) ----
        _, _, lh_, lw_ = label.shape
        lout_h, lout_w = _output_size(lh_, lw_, self.scale_size)
        rows = jnp.asarray((np.arange(lout_h) * lh_) // lout_h, dtype=jnp.int32)
        cols = jnp.asarray((np.arange(lout_w) * lw_) // lout_w, dtype=jnp.int32)
        label_out = jnp.take(jnp.take(label, rows, axis=2), cols, axis=3)

        return {"image": image_out, "label": label_out}


if __name__ == "__main__":
    key = jax.random.PRNGKey(0)
    k_img, k_lbl = jax.random.split(key)

    N, C, H, W = 2, 3, 16, 16
    scale_size = 8

    image = jax.random.uniform(k_img, (N, C, H, W), dtype=jnp.float32)       # [0, 1]
    label = jax.random.randint(k_lbl, (N, 1, H, W), 0, 21, dtype=jnp.int32)  # class ids

    resize = Resize(scale_size)
    out = resize({"image": image, "label": label})

    jax.block_until_ready(out["image"])
    jax.block_until_ready(out["label"])

    assert out["image"].shape == (N, C, scale_size, scale_size)
    assert out["label"].shape == (N, 1, scale_size, scale_size)
    assert out["image"].dtype == jnp.float32
    assert out["label"].dtype == jnp.int32

    # Reference check (same separable math in numpy, f32).  Kernel feeds the
    # MXU bf16 operands with f32 accumulation -> expect ~1e-3 abs error for
    # [0,1] images; 2e-2 tolerance covers it comfortably.
    img_np = np.asarray(image, dtype=np.float32).reshape(N * C, H, W)
    lh_np = _bilinear_aa_matrix(H, scale_size)
    rw_np = _bilinear_aa_matrix(W, scale_size)
    ref_img = np.einsum('ph,nhw,qw->npq', lh_np, img_np, rw_np)
    ref_img = ref_img.reshape(N, C, scale_size, scale_size)
    np.testing.assert_allclose(np.asarray(out["image"]), ref_img, atol=2e-2, rtol=0)

    rows_np = (np.arange(scale_size) * H) // scale_size
    cols_np = (np.arange(scale_size) * W) // scale_size
    ref_lbl = np.asarray(label)[:, :, rows_np][:, :, :, cols_np]
    np.testing.assert_array_equal(np.asarray(out["label"]), ref_lbl)

    print("KERNEL_OK")
</pallas_src>

<mosaic_0001>
module attributes {stable_mosaic.version = 11 : i64} {
  func.func @_resize_plane_block_kernel(%arg0: i32, %arg1: memref<2x16x16xf32, #tpu.memory_space<vmem>>, %arg2: memref<16x8xbf16, #tpu.memory_space<vmem>>, %arg3: memref<8x16xbf16, #tpu.memory_space<vmem>>, %arg4: memref<2x8x8xf32, #tpu.memory_space<vmem>>) attributes {dimension_semantics = [#tpu.dimension_semantics<parallel>], iteration_bounds = array<i64: 3>, scalar_prefetch = 0 : i64, scratch_operands = 0 : i64, tpu.core_type = #tpu.core_type<tc>, window_params = [{transform_indices = @transform_0, window_bounds = array<i64: 2, 16, 16>}, {pipeline_mode = #tpu.pipeline_mode<synchronous>, transform_indices = @transform_1, window_bounds = array<i64: 16, 8>}, {pipeline_mode = #tpu.pipeline_mode<synchronous>, transform_indices = @transform_2, window_bounds = array<i64: 8, 16>}, {transform_indices = @transform_3, window_bounds = array<i64: 2, 8, 8>}]} {
    %c0 = arith.constant 0 : index
    %c0_0 = arith.constant 0 : index
    %0 = vector.load %arg2[%c0, %c0_0] : memref<16x8xbf16, #tpu.memory_space<vmem>>, vector<16x8xbf16>
    %c0_1 = arith.constant 0 : index
    %c0_2 = arith.constant 0 : index
    %1 = vector.load %arg3[%c0_1, %c0_2] : memref<8x16xbf16, #tpu.memory_space<vmem>>, vector<8x16xbf16>
    %c0_i32 = arith.constant 0 : i32
    %c2_i32 = arith.constant 2 : i32
    %2 = arith.addi %c0_i32, %c2_i32 : i32
    %c1_i32 = arith.constant 1 : i32
    scf.for %arg5 = %c0_i32 to %2 step %c1_i32  : i32 {
      %3 = arith.index_cast %arg5 : i32 to index
      %c0_4 = arith.constant 0 : index
      %c0_5 = arith.constant 0 : index
      %4 = vector.load %arg1[%3, %c0_4, %c0_5] : memref<2x16x16xf32, #tpu.memory_space<vmem>>, vector<1x16x16xf32>
      %5 = vector.shape_cast %4 : vector<1x16x16xf32> to vector<16x16xf32>
      %6 = arith.truncf %5 : vector<16x16xf32> to vector<16x16xbf16>
      %cst = arith.constant dense<0.000000e+00> : vector<16x8xf32>
      %7 = tpu.matmul %6, %0, %cst {dimension_numbers = #tpu.dot_dimension_numbers<[1], [0], [0], [1], [0, 0, 1, 1], [], []>} : vector<16x16xbf16>, vector<16x8xbf16>, vector<16x8xf32> -> vector<16x8xf32>
      %8 = arith.truncf %7 : vector<16x8xf32> to vector<16x8xbf16>
      %cst_6 = arith.constant dense<0.000000e+00> : vector<8x8xf32>
      %9 = tpu.matmul %1, %8, %cst_6 {dimension_numbers = #tpu.dot_dimension_numbers<[1], [0], [0], [1], [0, 0, 1, 1], [], []>} : vector<8x16xbf16>, vector<16x8xbf16>, vector<8x8xf32> -> vector<8x8xf32>
      %10 = arith.index_cast %arg5 : i32 to index
      %c0_7 = arith.constant 0 : index
      %c0_8 = arith.constant 0 : index
      %11 = vector.load %arg4[%10, %c0_7, %c0_8] : memref<2x8x8xf32, #tpu.memory_space<vmem>>, vector<1x8x8xf32>
      %12 = vector.shape_cast %11 : vector<1x8x8xf32> to vector<8x8xf32>
      %13 = vector.shape_cast %9 : vector<8x8xf32> to vector<1x8x8xf32>
      tpu.vector_store %arg4[%10, %c0_7, %c0_8], %13 {strides = array<i32>} : memref<2x8x8xf32, #tpu.memory_space<vmem>>, vector<1x8x8xf32>,
    }
    %c2_i32_3 = arith.constant 2 : i32
    return
  }
  func.func @transform_0(%arg0: i32) -> (i32, i32, i32) {
    %c0_i32 = arith.constant 0 : i32
    %c0_i32_0 = arith.constant 0 : i32
    %c0_i32_1 = arith.constant 0 : i32
    return %arg0, %c0_i32, %c0_i32_0 : i32, i32, i32
  }
  func.func @transform_1(%arg0: i32) -> (i32, i32) {
    %c0_i32 = arith.constant 0 : i32
    %c0_i32_0 = arith.constant 0 : i32
    %c0_i32_1 = arith.constant 0 : i32
    return %c0_i32, %c0_i32_0 : i32, i32
  }
  func.func @transform_2(%arg0: i32) -> (i32, i32) {
    %c0_i32 = arith.constant 0 : i32
    %c0_i32_0 = arith.constant 0 : i32
    %c0_i32_1 = arith.constant 0 : i32
    return %c0_i32, %c0_i32_0 : i32, i32
  }
  func.func @transform_3(%arg0: i32) -> (i32, i32, i32) {
    %c0_i32 = arith.constant 0 : i32
    %c0_i32_0 = arith.constant 0 : i32
    %c0_i32_1 = arith.constant 0 : i32
    return %arg0, %c0_i32, %c0_i32_0 : i32, i32, i32
  }
}

</mosaic_0001>

<llo_original>
// kernel: tpu_custom_call.1
$region0: #{tpu_custom_call.1}
  #allocation0 [shape = 'u32[]', space=smem, size = 0x4, offset = 0x4, fixed_abs, tag = 'smem constant byte address 0x4 - core index']
  #allocation1 [shape = 'u32[144,128]{1,0:T(1,128)}', space=vmem, size = 0x12000, scoped, tag = 'internal scratch']
  %s0 = inlined_call_operand.hbm [shape: f32[6,16,16], index: 0, kind: input, shape index: {}]
  %s1 = inlined_call_operand.vmem [shape: bf16[16,8], index: 1, kind: input, shape index: {}]
  %s2 = inlined_call_operand.vmem [shape: bf16[8,16], index: 2, kind: input, shape index: {}]
  %s3 = inlined_call_operand.hbm [shape: f32[6,8,8], index: 3, kind: output, shape index: {}]
  %s4 = sld [smem:[#allocation0]]
  $region56: #{tpu_custom_call.1} parent=0
    _
  %s6 = ssub.s32 1, %s4
  %s7 = scalar_select 0, %s6, %s4
  $region1: #{tpu_custom_call.1} parent=0
    #allocation2 [shape = 'u8[32768]{0}', space=vmem, size = 0x8000, scoped, tag = 'input window, operand 0']
    #allocation3 [shape = 's32[2]{0}', space=sflag, size = 0x8, scoped, tag = 'scoped memory for tpu_custom_call.1']
    #allocation4 [shape = 's32[2]{0}', space=sflag, size = 0x8, scoped, tag = 'scoped memory for tpu_custom_call.1']
    #allocation5 [shape = 'u8[16384]{0}', space=vmem, size = 0x4000, scoped, tag = 'output window, operand 0']
    %8 = vsyncpa [#allocation3], 0
    %s9 = scalar_lea.sflag [#allocation3], 1
    %10 = vsyncpa %s9, 0
    %11 = vsyncpa [#allocation4], 0
    %s12 = scalar_lea.sflag [#allocation4], 1
    %13 = vsyncpa %s12, 0
    loop: start=0, step=1, limit=5
    $region2: #{tpu_custom_call.1} parent=1 // loop_pre_header
      _
    $region3: #{tpu_custom_call.1} parent=1 // loop_header
      %s15 = sphi 0, %s19
      %p16 = scmp.ge.s32.totalorder %s15, 5
      %s25 = sphi 0, %s27
      %s28 = sphi 0, %s25
      %s29 = sphi 0, %s28
      %s45 = sphi 0, %s29
      %s49 = sphi 0, %s49
      %s51 = sphi 0, %s49
      %s52 = sphi 0, %s51
      %s66 = sphi 0, %s52
      %s70 = sphi 0, %s70
      %s72 = sphi 0, %s70
      %s73 = sphi 0, %s72
      %s87 = sphi 0, %s73
      %s93 = sphi 0, %s95
      %s96 = sphi 0, %s93
      %s97 = sphi 0, %s96
      %s113 = sphi 0, %s97
    $region4: #{tpu_custom_call.1} parent=1 // loop_header_branch
      %18 = sbr.rel (%p16) target = $region8
    $region5: #{tpu_custom_call.1} parent=1 // loop_body
      %s20 = ssub.s32 %s15, 1
      %s21 = ssub.s32 %s15, 2
      %s22 = sadd.s32 %s15, 1
      %s23 = ssub.s32 %s15, %s22
      %p24 = scmp.eq.s32.totalorder %s23, 0
      %s26 = sadd.s32 %s25, 1
      %s27 = scalar_select %p24, %s25, %s26
      %p30 = pneg %p24
      %p31 = scmp.eq.s32.totalorder %s15, 2
      %p32 = por %p30, %p31
      %p33 = scmp.ne.s32.totalorder %s25, %s28
      %p34 = scmp.eq.s32.totalorder %s15, 0
      %p35 = por %p33, %p34
      %p36 = scmp.ne.s32.totalorder %s25, %s28
      %p37 = scmp.eq.s32.totalorder %s20, 2
      %p38 = por %p36, %p37
      %p39 = scmp.ne.s32.totalorder %s28, %s29
      %p40 = scmp.eq.s32.totalorder %s20, 0
      %p41 = por %p39, %p40
      %p42 = scmp.ne.s32.totalorder %s28, %s29
      %p43 = scmp.eq.s32.totalorder %s21, 2
      %p44 = por %p42, %p43
      %p46 = scmp.ne.s32.totalorder %s29, %s45
      %p47 = scmp.eq.s32.totalorder %s21, 0
      %p48 = por %p46, %p47
      %s50 = sadd.s32 %s49, 1
      %p53 = scmp.eq.s32.totalorder %s15, 2
      %p54 = scmp.ne.s32.totalorder %s49, %s51
      %p55 = scmp.eq.s32.totalorder %s15, 0
      %p56 = por %p54, %p55
      %p57 = scmp.ne.s32.totalorder %s49, %s51
      %p58 = scmp.eq.s32.totalorder %s20, 2
      %p59 = por %p57, %p58
      %p60 = scmp.ne.s32.totalorder %s51, %s52
      %p61 = scmp.eq.s32.totalorder %s20, 0
      %p62 = por %p60, %p61
      %p63 = scmp.ne.s32.totalorder %s51, %s52
      %p64 = scmp.eq.s32.totalorder %s21, 2
      %p65 = por %p63, %p64
      %p67 = scmp.ne.s32.totalorder %s52, %s66
      %p68 = scmp.eq.s32.totalorder %s21, 0
      %p69 = por %p67, %p68
      %s71 = sadd.s32 %s70, 1
      %p74 = scmp.eq.s32.totalorder %s15, 2
      %p75 = scmp.ne.s32.totalorder %s70, %s72
      %p76 = scmp.eq.s32.totalorder %s15, 0
      %p77 = por %p75, %p76
      %p78 = scmp.ne.s32.totalorder %s70, %s72
      %p79 = scmp.eq.s32.totalorder %s20, 2
      %p80 = por %p78, %p79
      %p81 = scmp.ne.s32.totalorder %s72, %s73
      %p82 = scmp.eq.s32.totalorder %s20, 0
      %p83 = por %p81, %p82
      %p84 = scmp.ne.s32.totalorder %s72, %s73
      %p85 = scmp.eq.s32.totalorder %s21, 2
      %p86 = por %p84, %p85
      %p88 = scmp.ne.s32.totalorder %s73, %s87
      %p89 = scmp.eq.s32.totalorder %s21, 0
      %p90 = por %p88, %p89
      %s91 = ssub.s32 %s15, %s22
      %p92 = scmp.eq.s32.totalorder %s91, 0
      %s94 = sadd.s32 %s93, 1
      %s95 = scalar_select %p92, %s93, %s94
      %p98 = pneg %p92
      %p99 = scmp.eq.s32.totalorder %s15, 2
      %p100 = por %p98, %p99
      %p101 = scmp.ne.s32.totalorder %s93, %s96
      %p102 = scmp.eq.s32.totalorder %s15, 0
      %p103 = por %p101, %p102
      %p104 = scmp.ne.s32.totalorder %s93, %s96
      %p105 = scmp.eq.s32.totalorder %s20, 2
      %p106 = por %p104, %p105
      %p107 = scmp.ne.s32.totalorder %s96, %s97
      %p108 = scmp.eq.s32.totalorder %s20, 0
      %p109 = por %p107, %p108
      %p110 = scmp.ne.s32.totalorder %s96, %s97
      %p111 = scmp.eq.s32.totalorder %s21, 2
      %p112 = por %p110, %p111
      %p114 = scmp.ne.s32.totalorder %s97, %s113
      %p115 = scmp.eq.s32.totalorder %s21, 0
      %p116 = por %p114, %p115
      %p117 = scmp.le.s32.totalorder 1, %s15
      %p118 = scmp.lt.s32.totalorder %s15, 4
      %p119 = pnand %p117, %p118
      %p120 = pneg %p119
      // Predicated region
      $region9: #{tpu_custom_call.1} parent=5 // pred_check
        _
      $region10: #{tpu_custom_call.1} parent=5 // pred_check_branch
        %122 = sbr.rel (%p119) target = $region12
      $region11: #{tpu_custom_call.1} parent=5 // pred_region
        %s123 = ssub.s32 %s15, 1
        // Predicated region
        $region13: #{tpu_custom_call.1} parent=11 // pred_check
          %p124 = pneg %p62
        $region14: #{tpu_custom_call.1} parent=11 // pred_check_branch
          %126 = sbr.rel (%p124) target = $region16
        $region15: #{tpu_custom_call.1} parent=11 // pred_region
          _
        $region16: #{tpu_custom_call.1} parent=11 // pred_fallthru
          _
        // Predicated region
        $region17: #{tpu_custom_call.1} parent=11 // pred_check
          %p127 = pneg %p83
        $region18: #{tpu_custom_call.1} parent=11 // pred_check_branch
          %129 = sbr.rel (%p127) target = $region20
        $region19: #{tpu_custom_call.1} parent=11 // pred_region
          _
        $region20: #{tpu_custom_call.1} parent=11 // pred_fallthru
          _
      $region12: #{tpu_custom_call.1} parent=5 // pred_fallthru
        _
      %p130 = scmp.lt.s32.totalorder %s15, 3
      // Predicated region
      $region21: #{tpu_custom_call.1} parent=5 // pred_check
        %p131 = pneg %p130
      $region22: #{tpu_custom_call.1} parent=5 // pred_check_branch
        %133 = sbr.rel (%p131) target = $region24
      $region23: #{tpu_custom_call.1} parent=5 // pred_region
        // Predicated region
        $region25: #{tpu_custom_call.1} parent=23 // pred_check
          %p134 = pneg %p35
        $region26: #{tpu_custom_call.1} parent=23 // pred_check_branch
          %136 = sbr.rel (%p134) target = $region28
        $region27: #{tpu_custom_call.1} parent=23 // pred_region
          %s137 = sand.u32 %s25, 1
          %s138 = scalar_lea.sflag [#allocation3], %s137
          %s139 = sand.u32 %s25, 1
          %s140 = smul.addr %s139, 32
          %s141 = scalar_lea.vmem [#allocation2], %s140
          %s142 = smul.u32 2, %s15
          %s144 = ssub.s32 512, 512
          %145 = vsyncadd %s138, %s144
          %s146 = smul.addr %s142, 2
          %s147 = smul.addr %s146, 128
          %s148 = scalar_lea.hbm %s0, %s147
          %s149 = sshll.u32 %s141, 4
          %s150 = int_to_ptr.vmem [resolvable:$true] %s149
          %155 = dma.hbm_to_vmem [thread:$0]  %s148, 512, %s150, %s138, 128, 128, 8
        $region28: #{tpu_custom_call.1} parent=23 // pred_fallthru
          _
      $region24: #{tpu_custom_call.1} parent=5 // pred_fallthru
        _
      %p156 = scmp.le.s32.totalorder 1, %s15
      %p157 = scmp.lt.s32.totalorder %s15, 4
      %p158 = pnand %p156, %p157
      %p159 = pneg %p158
      // Predicated region
      $region29: #{tpu_custom_call.1} parent=5 // pred_check
        _
      $region30: #{tpu_custom_call.1} parent=5 // pred_check_branch
        %161 = sbr.rel (%p158) target = $region32
      $region31: #{tpu_custom_call.1} parent=5 // pred_region
        %s162 = ssub.s32 %s15, 1
        %s163 = sand.u32 %s28, 1
        %s164 = scalar_lea.sflag [#allocation3], %s163
        %s165 = sand.u32 %s28, 1
        %s166 = smul.addr %s165, 32
        %s167 = scalar_lea.vmem [#allocation2], %s166
        // Predicated region
        $region33: #{tpu_custom_call.1} parent=31 // pred_check
          %p168 = pneg %p41
        $region34: #{tpu_custom_call.1} parent=31 // pred_check_branch
          %170 = sbr.rel (%p168) target = $region36
        $region35: #{tpu_custom_call.1} parent=31 // pred_region
          %171 = dma.done %s164, 512
        $region36: #{tpu_custom_call.1} parent=31 // pred_fallthru
          _
        %s172 = sand.u32 %s28, 1
        %s173 = scalar_lea.sflag [#allocation3], %s172
        %s174 = sand.u32 %s28, 1
        %s175 = smul.addr %s174, 32
        %s176 = scalar_lea.vmem [#allocation2], %s175
        %p177 = pneg %p41
        %p178 = pneg %p38
        %p179 = pneg %p62
        %p180 = pneg %p59
        %p181 = pneg %p83
        %p182 = pneg %p80
        %p183 = pneg %p109
        %p184 = pneg %p106
        %s185 = sand.u32 %s96, 1
        %s186 = scalar_lea.sflag [#allocation4], %s185
        %s187 = sand.u32 %s96, 1
        %s188 = smul.addr %s187, 16
        %s189 = scalar_lea.vmem [#allocation5], %s188
        %s190 = smul.u32 2, %s20
        %s191 = smul.u32 2, %s20
        %v193 = vld [vmem:[%s1] sm:$0xf]
        %v194 = vld [vmem:[%s1 + $0x4] sm:$0xf]
        %v195 = vld [vmem:[%s2] sm:$0xf]
        loop: start=0, step=1, limit=2
        $region37: #{tpu_custom_call.1} parent=31 // loop_pre_header
          _
        $region38: #{tpu_custom_call.1} parent=31 // loop_header
          %s197 = sphi 0, %s201
          %p198 = scmp.ge.s32.totalorder %s197, 2
        $region39: #{tpu_custom_call.1} parent=31 // loop_header_branch
          %200 = sbr.rel (%p198) target = $region43
        $region40: #{tpu_custom_call.1} parent=31 // loop_body
          %s202 = smul.u32 %s197, 16
          %s203 = scalar_lea.vmem %s167, %s202 [#allocation2]
          %v204 = vld [vmem:[%s203] sm:$0xff]
          %v205 = vld [vmem:[%s203 + $0x8] sm:$0xff]
          %v206 = vpack.c.bf16 %v205, %v204
          %v209 = vunpack.c.l.b16 %v193
          %v210 = vunpack.c.l.b16 %v194
          %v211 = vpack.c.b16 %v210, %v209
          %vm213 = vcmask 130048
          %v215 = vsel %vm213, %v206, 0
          %217 = vmatprep.subr.bf16.mxu0 0
          %218 = vmatpush1.bf16.msra.mxu0 %v211
          %219 = vmatprep.subr.bf16.mxu0 0
          %220 = vmatpush1.bf16.msra.mxu0 0
          %221 = vmatprep.subr.bf16.mxu0 0
          %222 = vmatpush1.bf16.msra.mxu0 0
          %223 = vmatprep.subr.bf16.mxu0 0
          %224 = vmatpush1.bf16.msra.mxu0 0
          %225 = vmatprep.subr.bf16.mxu0 0
          %226 = vmatpush1.bf16.msra.mxu0 0
          %227 = vmatprep.subr.bf16.mxu0 0
          %228 = vmatpush1.bf16.msra.mxu0 0
          %229 = vmatprep.subr.bf16.mxu0 0
          %230 = vmatpush1.bf16.msra.mxu0 0
          %231 = vmatprep.subr.bf16.mxu0 0
          %232 = vmatpush1.bf16.msra.mxu0 0
          %233 = vmatprep.subr.bf16.mxu0 0
          %234 = vmatpush1.bf16.msra.mxu0 0
          %235 = vmatprep.subr.bf16.mxu0 0
          %236 = vmatpush1.bf16.msra.mxu0 0
          %237 = vmatprep.subr.bf16.mxu0 0
          %238 = vmatpush1.bf16.msra.mxu0 0
          %239 = vmatprep.subr.bf16.mxu0 0
          %240 = vmatpush1.bf16.msra.mxu0 0
          %241 = vmatprep.subr.bf16.mxu0 0
          %242 = vmatpush1.bf16.msra.mxu0 0
          %243 = vmatprep.subr.bf16.mxu0 0
          %244 = vmatpush1.bf16.msra.mxu0 0
          %245 = vmatprep.subr.bf16.mxu0 0
          %246 = vmatpush1.bf16.msra.mxu0 0
          %247 = vmatprep.subr.bf16.mxu0 0
          %248 = vmatpush1.bf16.msra.mxu0 0
          %249 = vmatprep.mubr.bf16.mxu0 0
          %250 = vmatmul.mubr.bf16.gmra.mrb[0].mxu0 %v215
          %v251 = vpop.f32.mrb[0].mxu0
          %v252 = vadd.f32 0.0, %v251
          %v253 = vpop.f32.mrb[0].mxu0
          %v254 = vpop.f32.mrb[0].mxu0
          %v255 = vadd.f32 0.0, %v254
          %v256 = vpop.f32.mrb[0].mxu0
          %257 = vdwg.mxu0
          %v258 = vpack.c.bf16 %v255, %v252
          %v260 = vsel %vm213, %v195, 0
          %262 = vmatprep.subr.bf16.mxu0 0
          %263 = vmatpush1.bf16.msra.mxu0 %v258
          %264 = vmatprep.subr.bf16.mxu0 0
          %265 = vmatpush1.bf16.msra.mxu0 0
          %266 = vmatprep.subr.bf16.mxu0 0
          %267 = vmatpush1.bf16.msra.mxu0 0
          %268 = vmatprep.subr.bf16.mxu0 0
          %269 = vmatpush1.bf16.msra.mxu0 0
          %270 = vmatprep.subr.bf16.mxu0 0
          %271 = vmatpush1.bf16.msra.mxu0 0
          %272 = vmatprep.subr.bf16.mxu0 0
          %273 = vmatpush1.bf16.msra.mxu0 0
          %274 = vmatprep.subr.bf16.mxu0 0
          %275 = vmatpush1.bf16.msra.mxu0 0
          %276 = vmatprep.subr.bf16.mxu0 0
          %277 = vmatpush1.bf16.msra.mxu0 0
          %278 = vmatprep.subr.bf16.mxu0 0
          %279 = vmatpush1.bf16.msra.mxu0 0
          %280 = vmatprep.subr.bf16.mxu0 0
          %281 = vmatpush1.bf16.msra.mxu0 0
          %282 = vmatprep.subr.bf16.mxu0 0
          %283 = vmatpush1.bf16.msra.mxu0 0
          %284 = vmatprep.subr.bf16.mxu0 0
          %285 = vmatpush1.bf16.msra.mxu0 0
          %286 = vmatprep.subr.bf16.mxu0 0
          %287 = vmatpush1.bf16.msra.mxu0 0
          %288 = vmatprep.subr.bf16.mxu0 0
          %289 = vmatpush1.bf16.msra.mxu0 0
          %290 = vmatprep.subr.bf16.mxu0 0
          %291 = vmatpush1.bf16.msra.mxu0 0
          %292 = vmatprep.subr.bf16.mxu0 0
          %293 = vmatpush1.bf16.msra.mxu0 0
          %294 = vmatprep.mubr.bf16.mxu0 0
          %295 = vmatmul.mubr.bf16.gmra.mrb[0].mxu0 %v260
          %v296 = vpop.f32.mrb[0].mxu0
          %v297 = vadd.f32 0.0, %v296
          %v298 = vpop.f32.mrb[0].mxu0
          %v299 = vpop.f32.mrb[0].mxu0
          %v300 = vpop.f32.mrb[0].mxu0
          %301 = vdwg.mxu0
          %s302 = smul.u32 %s197, 8
          %s303 = scalar_lea.vmem %s189, %s302 [#allocation5]
          %vm304 = vcmask 64512
          %305 = vst.msk [vmem:[%s303] sm:$0xff] %vm304, %v297
        $region41: #{tpu_custom_call.1} parent=31 // loop_footer
          %s201 = sadd.s32 1, %s197
        $region42: #{tpu_custom_call.1} parent=31 // loop_footer_branch
          %196 = sbr.rel target = $region38
        $region43: #{tpu_custom_call.1} parent=31 // loop_exit
          _
        %s306 = sand.u32 %s96, 1
        %s307 = scalar_lea.sflag [#allocation4], %s306
        %s308 = sand.u32 %s96, 1
        %s309 = smul.addr %s308, 16
        %s310 = scalar_lea.vmem [#allocation5], %s309
        // Predicated region
        $region44: #{tpu_custom_call.1} parent=31 // pred_check
          %p311 = pneg %p106
        $region45: #{tpu_custom_call.1} parent=31 // pred_check_branch
          %313 = sbr.rel (%p311) target = $region47
        $region46: #{tpu_custom_call.1} parent=31 // pred_region
          %s314 = smul.u32 2, %s20
          %s316 = ssub.s32 256, 256
          %317 = vsyncadd %s307, %s316
          %s318 = smul.addr %s314, 128
          %s319 = scalar_lea.hbm %s3, %s318
          %s320 = sshll.u32 %s310, 4
          %s321 = int_to_ptr.vmem [resolvable:$true] %s320
          %326 = dma.vmem_to_hbm [thread:$0]  %s321, 256, %s319, %s307, 128, 128, 8
        $region47: #{tpu_custom_call.1} parent=31 // pred_fallthru
          _
      $region32: #{tpu_custom_call.1} parent=5 // pred_fallthru
        _
      %p327 = scmp.le.s32.totalorder 2, %s15
      // Predicated region
      $region48: #{tpu_custom_call.1} parent=5 // pred_check
        %p328 = pneg %p327
      $region49: #{tpu_custom_call.1} parent=5 // pred_check_branch
        %330 = sbr.rel (%p328) target = $region51
      $region50: #{tpu_custom_call.1} parent=5 // pred_region
        %s331 = ssub.s32 %s15, 2
        // Predicated region
        $region52: #{tpu_custom_call.1} parent=50 // pred_check
          %p332 = pneg %p112
        $region53: #{tpu_custom_call.1} parent=50 // pred_check_branch
          %334 = sbr.rel (%p332) target = $region55
        $region54: #{tpu_custom_call.1} parent=50 // pred_region
          %s335 = sand.u32 %s97, 1
          %s336 = scalar_lea.sflag [#allocation4], %s335
          %s337 = sand.u32 %s97, 1
          %s338 = smul.addr %s337, 16
          %s339 = scalar_lea.vmem [#allocation5], %s338
          %340 = dma.done %s336, 256
        $region55: #{tpu_custom_call.1} parent=50 // pred_fallthru
          _
      $region51: #{tpu_custom_call.1} parent=5 // pred_fallthru
        _
    $region6: #{tpu_custom_call.1} parent=1 // loop_footer
      %s19 = sadd.s32 1, %s15
    $region7: #{tpu_custom_call.1} parent=1 // loop_footer_branch
      %14 = sbr.rel target = $region3
    $region8: #{tpu_custom_call.1} parent=1 // loop_exit
      _
    %341 = vsyncpa [#allocation3], 1
    %s342 = scalar_lea.sflag [#allocation3], 1
    %343 = vsyncpa %s342, 1
    %344 = vsyncpa [#allocation4], 1
    %s345 = scalar_lea.sflag [#allocation4], 1
    %346 = vsyncpa %s345, 1

</llo_original>
